<compile_context>
chip_gen: v7x
topology: tpu7x:2x2x1
jax: 0.10.0
libtpu: 0.0.40
codegen_flags: <defaults>
</compile_context>

<pallas_src>
import functools
import math

import jax
import jax.numpy as jnp
from jax import lax
from jax.experimental import pallas as pl
from jax.experimental.pallas import tpu as pltpu

_EPS = 1e-12  # matches torch.nn.functional.normalize default eps


def _round_up(x, m):
    return ((x + m - 1) // m) * m


def _pad2(a, rows, cols):
    """Zero-pad a 2-D array to (rows, cols) in its ORIGINAL dtype; no-op if aligned."""
    r, c = a.shape
    if r == rows and c == cols:
        return a
    return jnp.pad(a, ((0, rows - r), (0, cols - c)))


def _hw_params():
    """Generation-aware tile parameters."""
    kind = ""
    try:
        kind = jax.devices()[0].device_kind.lower()
    except Exception:
        pass
    if "v5 lite" in kind or "v5e" in kind or "v5lite" in kind:
        # v5e: 4x128x128 MXU, bandwidth-starved, 16 MiB default scoped VMEM.
        return {"align": 128, "tb_max": 128, "tc": 512}
    # v6e / v7x: 2x256x256 MXU -> 256-aligned tiles, tb up to 256.
    return {"align": 256, "tb_max": 256, "tc": 512}


# --------------------------------------------------------------------------
# Stage 1: L2-normalize the proxy ONCE (hoisted out of the batch loop), bf16 out.
# --------------------------------------------------------------------------
def proxy_l2norm_kernel(p_ref, o_ref):
    p = p_ref[...].astype(jnp.float32)
    sumsq = jnp.sum(p * p, axis=1, keepdims=True)
    inv = lax.rsqrt(jnp.maximum(sumsq, _EPS * _EPS))   # == 1 / max(||p||, eps)
    o_ref[...] = (p * inv).astype(o_ref.dtype)


# --------------------------------------------------------------------------
# Stage 2: batch-tiled, CLASS-TILED logits + cross-entropy with running
# exp-sum / target-logit accumulators in VMEM scratch.
# --------------------------------------------------------------------------
def norm_softmax_kernel(x_ref, p_ref, tgt_ref, out_ref,
                        xl2_ref, sumexp_ref, tgtl_ref, *,
                        scale, n_valid_rows, n_classes, block_rows, block_cols):
    i = pl.program_id(0)          # batch tile
    j = pl.program_id(1)          # class block (reduction axis, innermost)
    nj = pl.num_programs(1)

    # --- once per batch tile: normalize the input tile, reset accumulators ---
    @pl.when(j == 0)
    def _():
        x = x_ref[...].astype(jnp.float32)                        # [tb, Dp]
        sumsq = jnp.sum(x * x, axis=1, keepdims=True)             # [tb, 1]
        xl2_ref[...] = (x * lax.rsqrt(jnp.maximum(sumsq, _EPS * _EPS))
                        ).astype(xl2_ref.dtype)                   # bf16
        sumexp_ref[...] = jnp.zeros_like(sumexp_ref)
        tgtl_ref[...] = jnp.zeros_like(tgtl_ref)

    # --- cosine logits for this class block: bf16 MXU operands, f32 acc,
    #     D-vs-D contraction (no transpose of the proxy block) ---
    logits = lax.dot_general(
        xl2_ref[...], p_ref[...],
        dimension_numbers=(((1,), (1,)), ((), ())),
        preferred_element_type=jnp.float32) * scale               # [tb, tc]

    cls = j * block_cols + lax.broadcasted_iota(jnp.int32, logits.shape, 1)

    # No max-subtraction: |logits| <= scale < 80, exp cannot overflow in f32.
    # Padded (fake) classes are excluded from the exp-sum.
    exp_l = jnp.where(cls < n_classes, jnp.exp(logits), 0.0)
    sumexp_ref[...] += jnp.sum(exp_l, axis=1, keepdims=True)      # [tb, 1]

    # target logit (no one-hot): targets live in a tiny [tb, 1] int32 column
    tgt = tgt_ref[...]                                            # [tb, 1]
    tgtl_ref[...] += jnp.sum(jnp.where(cls == tgt, logits, 0.0),
                             axis=1, keepdims=True)               # [tb, 1]

    # --- finalize after the last class block: per-tile partial loss sum ---
    @pl.when(j == nj - 1)
    def _():
        lse = jnp.log(sumexp_ref[...])                            # [tb, 1]
        per_sample = lse - tgtl_ref[...]
        row = i * block_rows + lax.broadcasted_iota(
            jnp.int32, per_sample.shape, 0)
        per_sample = jnp.where(row < n_valid_rows, per_sample, 0.0)
        tile_sum = jnp.sum(per_sample)                            # scalar
        # tiny lane-aligned output block: tile_sum at [0,0,0], zeros elsewhere
        r = lax.broadcasted_iota(jnp.int32, out_ref.shape, 1)
        l = lax.broadcasted_iota(jnp.int32, out_ref.shape, 2)
        out_ref[...] = ((r == 0) & (l == 0)).astype(jnp.float32) * tile_sum


def norm_softmax_loss(x, proxy, target, scale=23.0):
    B, D = x.shape
    C, D2 = proxy.shape
    assert D == D2
    # No-max-subtraction softmax requires exp(scale) to stay finite in f32.
    assert 0.0 < float(scale) < 80.0

    hw = _hw_params()
    align, tb_max = hw["align"], hw["tb_max"]

    Dp = _round_up(D, align)
    tc = min(hw["tc"], _round_up(C, align))      # class block (lane dim of logits)
    Cp = _round_up(C, tc)
    tb = _round_up(B, 8) if B <= tb_max else tb_max
    Bp = _round_up(B, tb)
    n_btiles = Bp // tb
    n_cblocks = Cp // tc

    # Pad only when needed, in the ORIGINAL dtype (no f32 upcast HBM copies).
    x_p = _pad2(x, Bp, Dp)
    proxy_p = _pad2(proxy, Cp, Dp)
    tgt_p = target.astype(jnp.int32).reshape(B, 1)
    if Bp != B:
        tgt_p = jnp.pad(tgt_p, ((0, Bp - B), (0, 0)))

    # ---- stage 1: normalize proxy once, emit bf16 (halves stage-2 stream) ----
    tile1 = min(256, tc)
    p_bytes = jnp.dtype(proxy.dtype).itemsize
    est1 = tile1 * Dp * (2 * p_bytes + 2 * 2)
    vmem1 = int(min(max(2 * est1, 32 << 20), 64 << 20))
    proxy_l2 = pl.pallas_call(
        proxy_l2norm_kernel,
        out_shape=jax.ShapeDtypeStruct((Cp, Dp), jnp.bfloat16),
        grid=(Cp // tile1,),
        in_specs=[pl.BlockSpec((tile1, Dp), lambda i: (i, 0))],
        out_specs=pl.BlockSpec((tile1, Dp), lambda i: (i, 0)),
        compiler_params=pltpu.CompilerParams(
            dimension_semantics=("parallel",), vmem_limit_bytes=vmem1),
    )(proxy_p)

    # ---- stage 2: class-tiled logits + cross-entropy partial sums ----
    kernel = functools.partial(
        norm_softmax_kernel, scale=float(scale), n_valid_rows=B,
        n_classes=C, block_rows=tb, block_cols=tc)

    x_bytes = jnp.dtype(x.dtype).itemsize
    est2 = (2 * tb * Dp * x_bytes      # double-buffered input tile
            + tb * Dp * 2              # normalized-input bf16 scratch
            + 2 * tc * Dp * 2          # double-buffered bf16 proxy block
            + 3 * tb * tc * 4          # logits / exp / select temporaries
            + 6 * tb * 4               # accumulators + target column
            + 2 * 8 * 128 * 4)         # output block
    vmem2 = int(min(max(2 * est2, 32 << 20), 64 << 20))

    partials = pl.pallas_call(
        kernel,
        out_shape=jax.ShapeDtypeStruct((n_btiles, 8, 128), jnp.float32),
        grid_spec=pltpu.PrefetchScalarGridSpec(
            num_scalar_prefetch=0,
            grid=(n_btiles, n_cblocks),
            in_specs=[
                pl.BlockSpec((tb, Dp), lambda i, j: (i, 0)),   # input tile (constant over j)
                pl.BlockSpec((tc, Dp), lambda i, j: (j, 0)),   # normalized proxy class block
                pl.BlockSpec((tb, 1), lambda i, j: (i, 0)),    # int32 targets (no one-hot)
            ],
            out_specs=pl.BlockSpec((1, 8, 128), lambda i, j: (i, 0, 0)),
            scratch_shapes=[
                pltpu.VMEM((tb, Dp), jnp.bfloat16),   # normalized input (reused over class blocks)
                pltpu.VMEM((tb, 1), jnp.float32),     # running exp-sum
                pltpu.VMEM((tb, 1), jnp.float32),     # running target logit
            ]),
        compiler_params=pltpu.CompilerParams(
            dimension_semantics=("parallel", "arbitrary"),
            vmem_limit_bytes=vmem2),
    )(x_p, proxy_l2, tgt_p)

    # partials is zero everywhere except [:, 0, 0]; full sum = sum of tile sums.
    return jnp.sum(partials) / B


if __name__ == "__main__":
    # Small shapes implied by the module's forward: input [B, D], proxy [C, D]
    B, D, C = 8, 32, 16
    scale = 23.0

    key = jax.random.PRNGKey(0)
    k_x, k_p = jax.random.split(key)

    x = jax.random.normal(k_x, (B, D), dtype=jnp.float32)

    # Deterministic kaiming_uniform_(a=sqrt(5)) equivalent:
    # bound = sqrt(6 / ((1 + a^2) * fan_in)) = 1 / sqrt(fan_in)
    bound = 1.0 / math.sqrt(D)
    proxy = jax.random.uniform(k_p, (C, D), dtype=jnp.float32,
                               minval=-bound, maxval=bound)

    # targets with adjacent labels different, as the module's docstring suggests
    target = jnp.arange(B, dtype=jnp.int32) % C

    loss = norm_softmax_loss(x, proxy, target, scale=scale)
    jax.block_until_ready(loss)

    # reference matching the kernel's math (bf16 MXU operands, f32 accumulation)
    def ref_loss_bf16(x, proxy, target, scale):
        xs = jnp.sum(x * x, axis=1, keepdims=True)
        ps = jnp.sum(proxy * proxy, axis=1, keepdims=True)
        xn = (x * lax.rsqrt(jnp.maximum(xs, _EPS * _EPS))).astype(jnp.bfloat16)
        pn = (proxy * lax.rsqrt(jnp.maximum(ps, _EPS * _EPS))).astype(jnp.bfloat16)
        logits = scale * jnp.dot(xn, pn.T, preferred_element_type=jnp.float32)
        logp = jax.nn.log_softmax(logits, axis=1)
        return -jnp.mean(logp[jnp.arange(x.shape[0]), target])

    # full-f32 reference = the original torch semantics
    def ref_loss_f32(x, proxy, target, scale):
        xn = x / jnp.maximum(jnp.linalg.norm(x, axis=1, keepdims=True), 1e-12)
        pn = proxy / jnp.maximum(jnp.linalg.norm(proxy, axis=1, keepdims=True), 1e-12)
        logits = scale * (xn @ pn.T)
        logp = jax.nn.log_softmax(logits, axis=1)
        return -jnp.mean(logp[jnp.arange(x.shape[0]), target])

    ref_bf16 = ref_loss_bf16(x, proxy, target, scale)
    ref_f32 = ref_loss_f32(x, proxy, target, scale)
    assert jnp.allclose(loss, ref_bf16, atol=2e-3, rtol=2e-3), (loss, ref_bf16)
    assert jnp.allclose(loss, ref_f32, atol=1e-1, rtol=1e-1), (loss, ref_f32)

    print("KERNEL_OK")
</pallas_src>

<mosaic_0001>
module attributes {stable_mosaic.version = 11 : i64} {
  func.func @proxy_l2norm_kernel(%arg0: i32, %arg1: memref<256x256xf32, #tpu.memory_space<vmem>>, %arg2: memref<256x256xbf16, #tpu.memory_space<vmem>>) attributes {dimension_semantics = [#tpu.dimension_semantics<parallel>], iteration_bounds = array<i64: 1>, scalar_prefetch = 0 : i64, scratch_operands = 0 : i64, tpu.core_type = #tpu.core_type<tc>, window_params = [{transform_indices = @transform_0, window_bounds = array<i64: 256, 256>}, {transform_indices = @transform_1, window_bounds = array<i64: 256, 256>}]} {
    %c0 = arith.constant 0 : index
    %c0_0 = arith.constant 0 : index
    %0 = vector.load %arg1[%c0, %c0_0] : memref<256x256xf32, #tpu.memory_space<vmem>>, vector<256x256xf32>
    %1 = arith.mulf %0, %0 : vector<256x256xf32>
    %cst = arith.constant dense<0.000000e+00> : vector<256xf32>
    %2 = vector.multi_reduction <add>, %1, %cst [1] : vector<256x256xf32> to vector<256xf32>
    %3 = vector.shape_cast %2 : vector<256xf32> to vector<256x1xf32>
    %cst_1 = arith.constant 1.000000e-24 : f32
    %4 = vector.broadcast %cst_1 : f32 to vector<256x1xf32>
    %5 = arith.maximumf %3, %4 : vector<256x1xf32>
    %6 = math.rsqrt %5 : vector<256x1xf32>
    %7 = vector.broadcast %6 : vector<256x1xf32> to vector<256x256xf32>
    %8 = arith.mulf %0, %7 : vector<256x256xf32>
    %9 = arith.truncf %8 : vector<256x256xf32> to vector<256x256xbf16>
    %c0_2 = arith.constant 0 : index
    %c0_3 = arith.constant 0 : index
    %10 = vector.load %arg2[%c0_2, %c0_3] : memref<256x256xbf16, #tpu.memory_space<vmem>>, vector<256x256xbf16>
    tpu.vector_store %arg2[%c0_2, %c0_3], %9 {strides = array<i32>} : memref<256x256xbf16, #tpu.memory_space<vmem>>, vector<256x256xbf16>,
    return
  }
  func.func @transform_0(%arg0: i32) -> (i32, i32) {
    %c0_i32 = arith.constant 0 : i32
    %c0_i32_0 = arith.constant 0 : i32
    return %arg0, %c0_i32 : i32, i32
  }
  func.func @transform_1(%arg0: i32) -> (i32, i32) {
    %c0_i32 = arith.constant 0 : i32
    %c0_i32_0 = arith.constant 0 : i32
    return %arg0, %c0_i32 : i32, i32
  }
}

</mosaic_0001>

<llo_original>
// kernel: tpu_custom_call.1
$region0: #{tpu_custom_call.1}
  #allocation0 [shape = 'u32[]', space=smem, size = 0x4, offset = 0x4, fixed_abs, tag = 'smem constant byte address 0x4 - core index']
  #allocation1 [shape = 'u32[144,128]{1,0:T(1,128)}', space=vmem, size = 0x12000, scoped, tag = 'internal scratch']
  %s0 = inlined_call_operand.hbm [shape: f32[256,256], index: 0, kind: input, shape index: {}]
  %s1 = inlined_call_operand.hbm [shape: bf16[256,256], index: 1, kind: output, shape index: {}]
  %s2 = sld [smem:[#allocation0]]
  $region18: #{tpu_custom_call.1} parent=0
    _
  %s4 = ssub.s32 1, %s2
  %s5 = scalar_select 0, %s4, %s2
  $region1: #{tpu_custom_call.1} parent=0
    #allocation2 [shape = 'u8[262144]{0}', space=vmem, size = 0x40000, scoped, tag = 'input window, operand 0, single buffered']
    #allocation3 [shape = 's32[1]{0}', space=sflag, size = 0x4, scoped, tag = 'scoped memory for tpu_custom_call.1']
    #allocation4 [shape = 's32[1]{0}', space=sflag, size = 0x4, scoped, tag = 'scoped memory for tpu_custom_call.1']
    #allocation5 [shape = 'u8[131072]{0}', space=vmem, size = 0x20000, scoped, tag = 'output window, operand 0, single buffered']
    %6 = vsyncpa [#allocation3], 0
    %7 = vsyncpa [#allocation4], 0
    // Predicated region
    $region2: #{tpu_custom_call.1} parent=1 // pred_check
      _
    $region3: #{tpu_custom_call.1} parent=1 // pred_check_branch
      %9 = sbr.rel (0) target = $region5
    $region4: #{tpu_custom_call.1} parent=1 // pred_region
      %s11 = ssub.s32 8192, 8192
      %12 = vsyncadd [#allocation3], %s11
      %s13 = sshll.u32 [#allocation2], 4
      %s14 = int_to_ptr.vmem [resolvable:$true] %s13
      %19 = dma.hbm_to_vmem [thread:$0]  %s0, 8192, %s14, [#allocation3], 256, 256, 16
    $region5: #{tpu_custom_call.1} parent=1 // pred_fallthru
      _
    // Predicated region
    $region6: #{tpu_custom_call.1} parent=1 // pred_check
      _
    $region7: #{tpu_custom_call.1} parent=1 // pred_check_branch
      %21 = sbr.rel (0) target = $region9
    $region8: #{tpu_custom_call.1} parent=1 // pred_region
      %22 = dma.done [#allocation3], 8192
    $region9: #{tpu_custom_call.1} parent=1 // pred_fallthru
      _
    %v23 = vld [vmem:[#allocation2] sm:$0xff]
    %v24 = vld [vmem:[#allocation2 + $0x8] sm:$0xff]
    %v25 = vld [vmem:[#allocation2 + $0x10] sm:$0xff]
    %v26 = vld [vmem:[#allocation2 + $0x18] sm:$0xff]
    %v27 = vld [vmem:[#allocation2 + $0x20] sm:$0xff]
    %v28 = vld [vmem:[#allocation2 + $0x28] sm:$0xff]
    %v29 = vld [vmem:[#allocation2 + $0x30] sm:$0xff]
    %v30 = vld [vmem:[#allocation2 + $0x38] sm:$0xff]
    %v31 = vld [vmem:[#allocation2 + $0x40] sm:$0xff]
    %v32 = vld [vmem:[#allocation2 + $0x48] sm:$0xff]
    %v33 = vld [vmem:[#allocation2 + $0x50] sm:$0xff]
    %v34 = vld [vmem:[#allocation2 + $0x58] sm:$0xff]
    %v35 = vld [vmem:[#allocation2 + $0x60] sm:$0xff]
    %v36 = vld [vmem:[#allocation2 + $0x68] sm:$0xff]
    %v37 = vld [vmem:[#allocation2 + $0x70] sm:$0xff]
    %v38 = vld [vmem:[#allocation2 + $0x78] sm:$0xff]
    %v39 = vld [vmem:[#allocation2 + $0x80] sm:$0xff]
    %v40 = vld [vmem:[#allocation2 + $0x88] sm:$0xff]
    %v41 = vld [vmem:[#allocation2 + $0x90] sm:$0xff]
    %v42 = vld [vmem:[#allocation2 + $0x98] sm:$0xff]
    %v43 = vld [vmem:[#allocation2 + $0xa0] sm:$0xff]
    %v44 = vld [vmem:[#allocation2 + $0xa8] sm:$0xff]
    %v45 = vld [vmem:[#allocation2 + $0xb0] sm:$0xff]
    %v46 = vld [vmem:[#allocation2 + $0xb8] sm:$0xff]
    %v47 = vld [vmem:[#allocation2 + $0xc0] sm:$0xff]
    %v48 = vld [vmem:[#allocation2 + $0xc8] sm:$0xff]
    %v49 = vld [vmem:[#allocation2 + $0xd0] sm:$0xff]
    %v50 = vld [vmem:[#allocation2 + $0xd8] sm:$0xff]
    %v51 = vld [vmem:[#allocation2 + $0xe0] sm:$0xff]
    %v52 = vld [vmem:[#allocation2 + $0xe8] sm:$0xff]
    %v53 = vld [vmem:[#allocation2 + $0xf0] sm:$0xff]
    %v54 = vld [vmem:[#allocation2 + $0xf8] sm:$0xff]
    %v55 = vld [vmem:[#allocation2 + $0x100] sm:$0xff]
    %v56 = vld [vmem:[#allocation2 + $0x108] sm:$0xff]
    %v57 = vld [vmem:[#allocation2 + $0x110] sm:$0xff]
    %v58 = vld [vmem:[#allocation2 + $0x118] sm:$0xff]
    %v59 = vld [vmem:[#allocation2 + $0x120] sm:$0xff]
    %v60 = vld [vmem:[#allocation2 + $0x128] sm:$0xff]
    %v61 = vld [vmem:[#allocation2 + $0x130] sm:$0xff]
    %v62 = vld [vmem:[#allocation2 + $0x138] sm:$0xff]
    %v63 = vld [vmem:[#allocation2 + $0x140] sm:$0xff]
    %v64 = vld [vmem:[#allocation2 + $0x148] sm:$0xff]
    %v65 = vld [vmem:[#allocation2 + $0x150] sm:$0xff]
    %v66 = vld [vmem:[#allocation2 + $0x158] sm:$0xff]
    %v67 = vld [vmem:[#allocation2 + $0x160] sm:$0xff]
    %v68 = vld [vmem:[#allocation2 + $0x168] sm:$0xff]
    %v69 = vld [vmem:[#allocation2 + $0x170] sm:$0xff]
    %v70 = vld [vmem:[#allocation2 + $0x178] sm:$0xff]
    %v71 = vld [vmem:[#allocation2 + $0x180] sm:$0xff]
    %v72 = vld [vmem:[#allocation2 + $0x188] sm:$0xff]
    %v73 = vld [vmem:[#allocation2 + $0x190] sm:$0xff]
    %v74 = vld [vmem:[#allocation2 + $0x198] sm:$0xff]
    %v75 = vld [vmem:[#allocation2 + $0x1a0] sm:$0xff]
    %v76 = vld [vmem:[#allocation2 + $0x1a8] sm:$0xff]
    %v77 = vld [vmem:[#allocation2 + $0x1b0] sm:$0xff]
    %v78 = vld [vmem:[#allocation2 + $0x1b8] sm:$0xff]
    %v79 = vld [vmem:[#allocation2 + $0x1c0] sm:$0xff]
    %v80 = vld [vmem:[#allocation2 + $0x1c8] sm:$0xff]
    %v81 = vld [vmem:[#allocation2 + $0x1d0] sm:$0xff]
    %v82 = vld [vmem:[#allocation2 + $0x1d8] sm:$0xff]
    %v83 = vld [vmem:[#allocation2 + $0x1e0] sm:$0xff]
    %v84 = vld [vmem:[#allocation2 + $0x1e8] sm:$0xff]
    %v85 = vld [vmem:[#allocation2 + $0x1f0] sm:$0xff]
    %v86 = vld [vmem:[#allocation2 + $0x1f8] sm:$0xff]
    %v87 = vmul.f32 %v23, %v23
    %v88 = vmul.f32 %v24, %v24
    %v89 = vmul.f32 %v25, %v25
    %v90 = vmul.f32 %v26, %v26
    %v91 = vmul.f32 %v27, %v27
    %v92 = vmul.f32 %v28, %v28
    %v93 = vmul.f32 %v29, %v29
    %v94 = vmul.f32 %v30, %v30
    %v95 = vmul.f32 %v31, %v31
    %v96 = vmul.f32 %v32, %v32
    %v97 = vmul.f32 %v33, %v33
    %v98 = vmul.f32 %v34, %v34
    %v99 = vmul.f32 %v35, %v35
    %v100 = vmul.f32 %v36, %v36
    %v101 = vmul.f32 %v37, %v37
    %v102 = vmul.f32 %v38, %v38
    %v103 = vmul.f32 %v39, %v39
    %v104 = vmul.f32 %v40, %v40
    %v105 = vmul.f32 %v41, %v41
    %v106 = vmul.f32 %v42, %v42
    %v107 = vmul.f32 %v43, %v43
    %v108 = vmul.f32 %v44, %v44
    %v109 = vmul.f32 %v45, %v45
    %v110 = vmul.f32 %v46, %v46
    %v111 = vmul.f32 %v47, %v47
    %v112 = vmul.f32 %v48, %v48
    %v113 = vmul.f32 %v49, %v49
    %v114 = vmul.f32 %v50, %v50
    %v115 = vmul.f32 %v51, %v51
    %v116 = vmul.f32 %v52, %v52
    %v117 = vmul.f32 %v53, %v53
    %v118 = vmul.f32 %v54, %v54
    %v119 = vmul.f32 %v55, %v55
    %v120 = vmul.f32 %v56, %v56
    %v121 = vmul.f32 %v57, %v57
    %v122 = vmul.f32 %v58, %v58
    %v123 = vmul.f32 %v59, %v59
    %v124 = vmul.f32 %v60, %v60
    %v125 = vmul.f32 %v61, %v61
    %v126 = vmul.f32 %v62, %v62
    %v127 = vmul.f32 %v63, %v63
    %v128 = vmul.f32 %v64, %v64
    %v129 = vmul.f32 %v65, %v65
    %v130 = vmul.f32 %v66, %v66
    %v131 = vmul.f32 %v67, %v67
    %v132 = vmul.f32 %v68, %v68
    %v133 = vmul.f32 %v69, %v69
    %v134 = vmul.f32 %v70, %v70
    %v135 = vmul.f32 %v71, %v71
    %v136 = vmul.f32 %v72, %v72
    %v137 = vmul.f32 %v73, %v73
    %v138 = vmul.f32 %v74, %v74
    %v139 = vmul.f32 %v75, %v75
    %v140 = vmul.f32 %v76, %v76
    %v141 = vmul.f32 %v77, %v77
    %v142 = vmul.f32 %v78, %v78
    %v143 = vmul.f32 %v79, %v79
    %v144 = vmul.f32 %v80, %v80
    %v145 = vmul.f32 %v81, %v81
    %v146 = vmul.f32 %v82, %v82
    %v147 = vmul.f32 %v83, %v83
    %v148 = vmul.f32 %v84, %v84
    %v149 = vmul.f32 %v85, %v85
    %v150 = vmul.f32 %v86, %v86
    %v151 = vadd.f32 %v87, %v88
    %152 = vadd.xlane.f32.xlu0 %v151
    %v153 = vpop.xlane.xlu0 %152
    %v154 = vadd.f32 %v89, %v90
    %155 = vadd.xlane.f32.xlu0 %v154
    %v156 = vpop.xlane.xlu0 %155
    %v157 = vadd.f32 %v91, %v92
    %158 = vadd.xlane.f32.xlu0 %v157
    %v159 = vpop.xlane.xlu0 %158
    %v160 = vadd.f32 %v93, %v94
    %161 = vadd.xlane.f32.xlu0 %v160
    %v162 = vpop.xlane.xlu0 %161
    %v163 = vadd.f32 %v95, %v96
    %164 = vadd.xlane.f32.xlu0 %v163
    %v165 = vpop.xlane.xlu0 %164
    %v166 = vadd.f32 %v97, %v98
    %167 = vadd.xlane.f32.xlu0 %v166
    %v168 = vpop.xlane.xlu0 %167
    %v169 = vadd.f32 %v99, %v100
    %170 = vadd.xlane.f32.xlu0 %v169
    %v171 = vpop.xlane.xlu0 %170
    %v172 = vadd.f32 %v101, %v102
    %173 = vadd.xlane.f32.xlu0 %v172
    %v174 = vpop.xlane.xlu0 %173
    %v175 = vadd.f32 %v103, %v104
    %176 = vadd.xlane.f32.xlu0 %v175
    %v177 = vpop.xlane.xlu0 %176
    %v178 = vadd.f32 %v105, %v106
    %179 = vadd.xlane.f32.xlu0 %v178
    %v180 = vpop.xlane.xlu0 %179
    %v181 = vadd.f32 %v107, %v108
    %182 = vadd.xlane.f32.xlu0 %v181
    %v183 = vpop.xlane.xlu0 %182
    %v184 = vadd.f32 %v109, %v110
    %185 = vadd.xlane.f32.xlu0 %v184
    %v186 = vpop.xlane.xlu0 %185
    %v187 = vadd.f32 %v111, %v112
    %188 = vadd.xlane.f32.xlu0 %v187
    %v189 = vpop.xlane.xlu0 %188
    %v190 = vadd.f32 %v113, %v114
    %191 = vadd.xlane.f32.xlu0 %v190
    %v192 = vpop.xlane.xlu0 %191
    %v193 = vadd.f32 %v115, %v116
    %194 = vadd.xlane.f32.xlu0 %v193
    %v195 = vpop.xlane.xlu0 %194
    %v196 = vadd.f32 %v117, %v118
    %197 = vadd.xlane.f32.xlu0 %v196
    %v198 = vpop.xlane.xlu0 %197
    %v199 = vadd.f32 %v119, %v120
    %200 = vadd.xlane.f32.xlu0 %v199
    %v201 = vpop.xlane.xlu0 %200
    %v202 = vadd.f32 %v121, %v122
    %203 = vadd.xlane.f32.xlu0 %v202
    %v204 = vpop.xlane.xlu0 %203
    %v205 = vadd.f32 %v123, %v124
    %206 = vadd.xlane.f32.xlu0 %v205
    %v207 = vpop.xlane.xlu0 %206
    %v208 = vadd.f32 %v125, %v126
    %209 = vadd.xlane.f32.xlu0 %v208
    %v210 = vpop.xlane.xlu0 %209
    %v211 = vadd.f32 %v127, %v128
    %212 = vadd.xlane.f32.xlu0 %v211
    %v213 = vpop.xlane.xlu0 %212
    %v214 = vadd.f32 %v129, %v130
    %215 = vadd.xlane.f32.xlu0 %v214
    %v216 = vpop.xlane.xlu0 %215
    %v217 = vadd.f32 %v131, %v132
    %218 = vadd.xlane.f32.xlu0 %v217
    %v219 = vpop.xlane.xlu0 %218
    %v220 = vadd.f32 %v133, %v134
    %221 = vadd.xlane.f32.xlu0 %v220
    %v222 = vpop.xlane.xlu0 %221
    %v223 = vadd.f32 %v135, %v136
    %224 = vadd.xlane.f32.xlu0 %v223
    %v225 = vpop.xlane.xlu0 %224
    %v226 = vadd.f32 %v137, %v138
    %227 = vadd.xlane.f32.xlu0 %v226
    %v228 = vpop.xlane.xlu0 %227
    %v229 = vadd.f32 %v139, %v140
    %230 = vadd.xlane.f32.xlu0 %v229
    %v231 = vpop.xlane.xlu0 %230
    %v232 = vadd.f32 %v141, %v142
    %233 = vadd.xlane.f32.xlu0 %v232
    %v234 = vpop.xlane.xlu0 %233
    %v235 = vadd.f32 %v143, %v144
    %236 = vadd.xlane.f32.xlu0 %v235
    %v237 = vpop.xlane.xlu0 %236
    %v238 = vadd.f32 %v145, %v146
    %239 = vadd.xlane.f32.xlu0 %v238
    %v240 = vpop.xlane.xlu0 %239
    %v241 = vadd.f32 %v147, %v148
    %242 = vadd.xlane.f32.xlu0 %v241
    %v243 = vpop.xlane.xlu0 %242
    %v244 = vadd.f32 %v149, %v150
    %245 = vadd.xlane.f32.xlu0 %v244
    %v246 = vpop.xlane.xlu0 %245
    %v247 = vmax.f32 %v153, 1e-24
    %v248 = vmax.f32 %v156, 1e-24
    %v249 = vmax.f32 %v159, 1e-24
    %v250 = vmax.f32 %v162, 1e-24
    %v251 = vmax.f32 %v165, 1e-24
    %v252 = vmax.f32 %v168, 1e-24
    %v253 = vmax.f32 %v171, 1e-24
    %v254 = vmax.f32 %v174, 1e-24
    %v255 = vmax.f32 %v177, 1e-24
    %v256 = vmax.f32 %v180, 1e-24
    %v257 = vmax.f32 %v183, 1e-24
    %v258 = vmax.f32 %v186, 1e-24
    %v259 = vmax.f32 %v189, 1e-24
    %v260 = vmax.f32 %v192, 1e-24
    %v261 = vmax.f32 %v195, 1e-24
    %v262 = vmax.f32 %v198, 1e-24
    %v263 = vmax.f32 %v201, 1e-24
    %v264 = vmax.f32 %v204, 1e-24
    %v265 = vmax.f32 %v207, 1e-24
    %v266 = vmax.f32 %v210, 1e-24
    %v267 = vmax.f32 %v213, 1e-24
    %v268 = vmax.f32 %v216, 1e-24
    %v269 = vmax.f32 %v219, 1e-24
    %v270 = vmax.f32 %v222, 1e-24
    %v271 = vmax.f32 %v225, 1e-24
    %v272 = vmax.f32 %v228, 1e-24
    %v273 = vmax.f32 %v231, 1e-24
    %v274 = vmax.f32 %v234, 1e-24
    %v275 = vmax.f32 %v237, 1e-24
    %v276 = vmax.f32 %v240, 1e-24
    %v277 = vmax.f32 %v243, 1e-24
    %v278 = vmax.f32 %v246, 1e-24
    %v279 = vrsqrt.pop %v247
    %v280 = vrsqrt.pop %v248
    %v281 = vrsqrt.pop %v249
    %v282 = vrsqrt.pop %v250
    %v283 = vrsqrt.pop %v251
    %v284 = vrsqrt.pop %v252
    %v285 = vrsqrt.pop %v253
    %v286 = vrsqrt.pop %v254
    %v287 = vrsqrt.pop %v255
    %v288 = vrsqrt.pop %v256
    %v289 = vrsqrt.pop %v257
    %v290 = vrsqrt.pop %v258
    %v291 = vrsqrt.pop %v259
    %v292 = vrsqrt.pop %v260
    %v293 = vrsqrt.pop %v261
    %v294 = vrsqrt.pop %v262
    %v295 = vrsqrt.pop %v263
    %v296 = vrsqrt.pop %v264
    %v297 = vrsqrt.pop %v265
    %v298 = vrsqrt.pop %v266
    %v299 = vrsqrt.pop %v267
    %v300 = vrsqrt.pop %v268
    %v301 = vrsqrt.pop %v269
    %v302 = vrsqrt.pop %v270
    %v303 = vrsqrt.pop %v271
    %v304 = vrsqrt.pop %v272
    %v305 = vrsqrt.pop %v273
    %v306 = vrsqrt.pop %v274
    %v307 = vrsqrt.pop %v275
    %v308 = vrsqrt.pop %v276
    %v309 = vrsqrt.pop %v277
    %v310 = vrsqrt.pop %v278
    %v311 = vmul.f32 %v23, %v279
    %v312 = vmul.f32 %v24, %v279
    %v313 = vmul.f32 %v25, %v280
    %v314 = vmul.f32 %v26, %v280
    %v315 = vmul.f32 %v27, %v281
    %v316 = vmul.f32 %v28, %v281
    %v317 = vmul.f32 %v29, %v282
    %v318 = vmul.f32 %v30, %v282
    %v319 = vmul.f32 %v31, %v283
    %v320 = vmul.f32 %v32, %v283
    %v321 = vmul.f32 %v33, %v284
    %v322 = vmul.f32 %v34, %v284
    %v323 = vmul.f32 %v35, %v285
    %v324 = vmul.f32 %v36, %v285
    %v325 = vmul.f32 %v37, %v286
    %v326 = vmul.f32 %v38, %v286
    %v327 = vmul.f32 %v39, %v287
    %v328 = vmul.f32 %v40, %v287
    %v329 = vmul.f32 %v41, %v288
    %v330 = vmul.f32 %v42, %v288
    %v331 = vmul.f32 %v43, %v289
    %v332 = vmul.f32 %v44, %v289
    %v333 = vmul.f32 %v45, %v290
    %v334 = vmul.f32 %v46, %v290
    %v335 = vmul.f32 %v47, %v291
    %v336 = vmul.f32 %v48, %v291
    %v337 = vmul.f32 %v49, %v292
    %v338 = vmul.f32 %v50, %v292
    %v339 = vmul.f32 %v51, %v293
    %v340 = vmul.f32 %v52, %v293
    %v341 = vmul.f32 %v53, %v294
    %v342 = vmul.f32 %v54, %v294
    %v343 = vmul.f32 %v55, %v295
    %v344 = vmul.f32 %v56, %v295
    %v345 = vmul.f32 %v57, %v296
    %v346 = vmul.f32 %v58, %v296
    %v347 = vmul.f32 %v59, %v297
    %v348 = vmul.f32 %v60, %v297
    %v349 = vmul.f32 %v61, %v298
    %v350 = vmul.f32 %v62, %v298
    %v351 = vmul.f32 %v63, %v299
    %v352 = vmul.f32 %v64, %v299
    %v353 = vmul.f32 %v65, %v300
    %v354 = vmul.f32 %v66, %v300
    %v355 = vmul.f32 %v67, %v301
    %v356 = vmul.f32 %v68, %v301
    %v357 = vmul.f32 %v69, %v302
    %v358 = vmul.f32 %v70, %v302
    %v359 = vmul.f32 %v71, %v303
    %v360 = vmul.f32 %v72, %v303
    %v361 = vmul.f32 %v73, %v304
    %v362 = vmul.f32 %v74, %v304
    %v363 = vmul.f32 %v75, %v305
    %v364 = vmul.f32 %v76, %v305
    %v365 = vmul.f32 %v77, %v306
    %v366 = vmul.f32 %v78, %v306
    %v367 = vmul.f32 %v79, %v307
    %v368 = vmul.f32 %v80, %v307
    %v369 = vmul.f32 %v81, %v308
    %v370 = vmul.f32 %v82, %v308
    %v371 = vmul.f32 %v83, %v309
    %v372 = vmul.f32 %v84, %v309
    %v373 = vmul.f32 %v85, %v310
    %v374 = vmul.f32 %v86, %v310
    %v375 = vpack.c.bf16 %v313, %v311
    %v376 = vpack.c.bf16 %v314, %v312
    %v377 = vpack.c.bf16 %v317, %v315
    %v378 = vpack.c.bf16 %v318, %v316
    %v379 = vpack.c.bf16 %v321, %v319
    %v380 = vpack.c.bf16 %v322, %v320
    %v381 = vpack.c.bf16 %v325, %v323
    %v382 = vpack.c.bf16 %v326, %v324
    %v383 = vpack.c.bf16 %v329, %v327
    %v384 = vpack.c.bf16 %v330, %v328
    %v385 = vpack.c.bf16 %v333, %v331
    %v386 = vpack.c.bf16 %v334, %v332
    %v387 = vpack.c.bf16 %v337, %v335
    %v388 = vpack.c.bf16 %v338, %v336
    %v389 = vpack.c.bf16 %v341, %v339
    %v390 = vpack.c.bf16 %v342, %v340
    %v391 = vpack.c.bf16 %v345, %v343
    %v392 = vpack.c.bf16 %v346, %v344
    %v393 = vpack.c.bf16 %v349, %v347
    %v394 = vpack.c.bf16 %v350, %v348
    %v395 = vpack.c.bf16 %v353, %v351
    %v396 = vpack.c.bf16 %v354, %v352
    %v397 = vpack.c.bf16 %v357, %v355
    %v398 = vpack.c.bf16 %v358, %v356
    %v399 = vpack.c.bf16 %v361, %v359
    %v400 = vpack.c.bf16 %v362, %v360
    %v401 = vpack.c.bf16 %v365, %v363
    %v402 = vpack.c.bf16 %v366, %v364
    %v403 = vpack.c.bf16 %v369, %v367
    %v404 = vpack.c.bf16 %v370, %v368
    %v405 = vpack.c.bf16 %v373, %v371
    %v406 = vpack.c.bf16 %v374, %v372
    %v439 = vunpack.c.l.b16 %v375
    %v440 = vunpack.c.l.b16 %v376
    %v441 = vunpack.c.h.b16 %v375
    %v442 = vunpack.c.h.b16 %v376
    %v443 = vunpack.c.l.b16 %v377
    %v444 = vunpack.c.l.b16 %v378
    %v445 = vunpack.c.h.b16 %v377
    %v446 = vunpack.c.h.b16 %v378
    %v447 = vunpack.c.l.b16 %v379
    %v448 = vunpack.c.l.b16 %v380
    %v449 = vunpack.c.h.b16 %v379
    %v450 = vunpack.c.h.b16 %v380
    %v451 = vunpack.c.l.b16 %v381
    %v452 = vunpack.c.l.b16 %v382
    %v453 = vunpack.c.h.b16 %v381
    %v454 = vunpack.c.h.b16 %v382
    %v455 = vunpack.c.l.b16 %v383
    %v456 = vunpack.c.l.b16 %v384
    %v457 = vunpack.c.h.b16 %v383
    %v458 = vunpack.c.h.b16 %v384
    %v459 = vunpack.c.l.b16 %v385
    %v460 = vunpack.c.l.b16 %v386
    %v461 = vunpack.c.h.b16 %v385
    %v462 = vunpack.c.h.b16 %v386
    %v463 = vunpack.c.l.b16 %v387
    %v464 = vunpack.c.l.b16 %v388
    %v465 = vunpack.c.h.b16 %v387
    %v466 = vunpack.c.h.b16 %v388
    %v467 = vunpack.c.l.b16 %v389
    %v468 = vunpack.c.l.b16 %v390
    %v469 = vunpack.c.h.b16 %v389
    %v470 = vunpack.c.h.b16 %v390
    %v471 = vunpack.c.l.b16 %v391
    %v472 = vunpack.c.l.b16 %v392
    %v473 = vunpack.c.h.b16 %v391
    %v474 = vunpack.c.h.b16 %v392
    %v475 = vunpack.c.l.b16 %v393
    %v476 = vunpack.c.l.b16 %v394
    %v477 = vunpack.c.h.b16 %v393
    %v478 = vunpack.c.h.b16 %v394
    %v479 = vunpack.c.l.b16 %v395
    %v480 = vunpack.c.l.b16 %v396
    %v481 = vunpack.c.h.b16 %v395
    %v482 = vunpack.c.h.b16 %v396
    %v483 = vunpack.c.l.b16 %v397
    %v484 = vunpack.c.l.b16 %v398
    %v485 = vunpack.c.h.b16 %v397
    %v486 = vunpack.c.h.b16 %v398
    %v487 = vunpack.c.l.b16 %v399
    %v488 = vunpack.c.l.b16 %v400
    %v489 = vunpack.c.h.b16 %v399
    %v490 = vunpack.c.h.b16 %v400
    %v491 = vunpack.c.l.b16 %v401
    %v492 = vunpack.c.l.b16 %v402
    %v493 = vunpack.c.h.b16 %v401
    %v494 = vunpack.c.h.b16 %v402
    %v495 = vunpack.c.l.b16 %v403
    %v496 = vunpack.c.l.b16 %v404
    %v497 = vunpack.c.h.b16 %v403
    %v498 = vunpack.c.h.b16 %v404
    %v499 = vunpack.c.l.b16 %v405
    %v500 = vunpack.c.l.b16 %v406
    %v501 = vunpack.c.h.b16 %v405
    %v502 = vunpack.c.h.b16 %v406
    %v503 = vpack.c.b16 %v440, %v439
    %v504 = vpack.c.b16 %v442, %v441
    %v505 = vpack.c.b16 %v444, %v443
    %v506 = vpack.c.b16 %v446, %v445
    %v507 = vpack.c.b16 %v448, %v447
    %v508 = vpack.c.b16 %v450, %v449
    %v509 = vpack.c.b16 %v452, %v451
    %v510 = vpack.c.b16 %v454, %v453
    %v511 = vpack.c.b16 %v456, %v455
    %v512 = vpack.c.b16 %v458, %v457
    %v513 = vpack.c.b16 %v460, %v459
    %v514 = vpack.c.b16 %v462, %v461
    %v515 = vpack.c.b16 %v464, %v463
    %v516 = vpack.c.b16 %v466, %v465
    %v517 = vpack.c.b16 %v468, %v467
    %v518 = vpack.c.b16 %v470, %v469
    %v519 = vpack.c.b16 %v472, %v471
    %v520 = vpack.c.b16 %v474, %v473
    %v521 = vpack.c.b16 %v476, %v475
    %v522 = vpack.c.b16 %v478, %v477
    %v523 = vpack.c.b16 %v480, %v479
    %v524 = vpack.c.b16 %v482, %v481
    %v525 = vpack.c.b16 %v484, %v483
    %v526 = vpack.c.b16 %v486, %v485
    %v527 = vpack.c.b16 %v488, %v487
    %v528 = vpack.c.b16 %v490, %v489
    %v529 = vpack.c.b16 %v492, %v491
    %v530 = vpack.c.b16 %v494, %v493
    %v531 = vpack.c.b16 %v496, %v495
    %v532 = vpack.c.b16 %v498, %v497
    %v533 = vpack.c.b16 %v500, %v499
    %v534 = vpack.c.b16 %v502, %v501
    %567 = vst [vmem:[#allocation5] sm:$0xff] %v503
    %568 = vst [vmem:[#allocation5 + $0x8] sm:$0xff] %v504
    %569 = vst [vmem:[#allocation5 + $0x10] sm:$0xff] %v505
    %570 = vst [vmem:[#allocation5 + $0x18] sm:$0xff] %v506
    %571 = vst [vmem:[#allocation5 + $0x20] sm:$0xff] %v507
    %572 = vst [vmem:[#allocation5 + $0x28] sm:$0xff] %v508
    %573 = vst [vmem:[#allocation5 + $0x30] sm:$0xff] %v509
    %574 = vst [vmem:[#allocation5 + $0x38] sm:$0xff] %v510
    %575 = vst [vmem:[#allocation5 + $0x40] sm:$0xff] %v511
    %576 = vst [vmem:[#allocation5 + $0x48] sm:$0xff] %v512
    %577 = vst [vmem:[#allocation5 + $0x50] sm:$0xff] %v513
    %578 = vst [vmem:[#allocation5 + $0x58] sm:$0xff] %v514
    %579 = vst [vmem:[#allocation5 + $0x60] sm:$0xff] %v515
    %580 = vst [vmem:[#allocation5 + $0x68] sm:$0xff] %v516
    %581 = vst [vmem:[#allocation5 + $0x70] sm:$0xff] %v517
    %582 = vst [vmem:[#allocation5 + $0x78] sm:$0xff] %v518
    %583 = vst [vmem:[#allocation5 + $0x80] sm:$0xff] %v519
    %584 = vst [vmem:[#allocation5 + $0x88] sm:$0xff] %v520
    %585 = vst [vmem:[#allocation5 + $0x90] sm:$0xff] %v521
    %586 = vst [vmem:[#allocation5 + $0x98] sm:$0xff] %v522
    %587 = vst [vmem:[#allocation5 + $0xa0] sm:$0xff] %v523
    %588 = vst [vmem:[#allocation5 + $0xa8] sm:$0xff] %v524
    %589 = vst [vmem:[#allocation5 + $0xb0] sm:$0xff] %v525
    %590 = vst [vmem:[#allocation5 + $0xb8] sm:$0xff] %v526
    %591 = vst [vmem:[#allocation5 + $0xc0] sm:$0xff] %v527
    %592 = vst [vmem:[#allocation5 + $0xc8] sm:$0xff] %v528
    %593 = vst [vmem:[#allocation5 + $0xd0] sm:$0xff] %v529
    %594 = vst [vmem:[#allocation5 + $0xd8] sm:$0xff] %v530
    %595 = vst [vmem:[#allocation5 + $0xe0] sm:$0xff] %v531
    %596 = vst [vmem:[#allocation5 + $0xe8] sm:$0xff] %v532
    %597 = vst [vmem:[#allocation5 + $0xf0] sm:$0xff] %v533
    %598 = vst [vmem:[#allocation5 + $0xf8] sm:$0xff] %v534
    // Predicated region
    $region10: #{tpu_custom_call.1} parent=1 // pred_check
      _
    $region11: #{tpu_custom_call.1} parent=1 // pred_check_branch
      %600 = sbr.rel (0) target = $region13
    $region12: #{tpu_custom_call.1} parent=1 // pred_region
      %s602 = ssub.s32 4096, 4096
      %603 = vsyncadd [#allocation4], %s602
      %s604 = sshll.u32 [#allocation5], 4
      %s605 = int_to_ptr.vmem [resolvable:$true] %s604
      %610 = dma.vmem_to_hbm [thread:$0]  %s605, 4096, %s1, [#allocation4], 128, 128, 8
    $region13: #{tpu_custom_call.1} parent=1 // pred_fallthru
      _
    // Predicated region
    $region14: #{tpu_custom_call.1} parent=1 // pred_check
      _
    $region15: #{tpu_custom_call.1} parent=1 // pred_check_branch
      %612 = sbr.rel (0) target = $region17
    $region16: #{tpu_custom_call.1} parent=1 // pred_region
      %613 = dma.done [#allocation4], 4096
    $region17: #{tpu_custom_call.1} parent=1 // pred_fallthru
      _
    %614 = vsyncpa [#allocation3], 1
    %615 = vsyncpa [#allocation4], 1

</llo_original>
